<compile_context>
chip_gen: v5e
topology: v5e:2x2
jax: 0.10.0
libtpu: 0.0.40
codegen_flags: <defaults>
</compile_context>

<pallas_src>
import jax
import jax.numpy as jnp
from jax.experimental import pallas as pl
from jax.experimental.pallas import tpu as pltpu

# ---------------- configuration (small demo shapes) ----------------
B = 2              # batch
NUM_SAMPLES = 1    # retina num_samples (the torch forward's sum requires 1)
P = 16             # num_points_per_pc
P_S = 8            # num_points_per_sample
H_G = 32           # hidden size for "what" branch
H_L = 16           # hidden size for "where"/"how" branches
H_OUT = H_G + H_L  # glimpse feature size


def _round_up(x, m):
    return ((x + m - 1) // m) * m


# ---------------- retina (JAX glue, deterministic surrogate) ----------------
def extract_box(pts, l, d):
    """pts: (B, 3, P); l: (B, 3); d: (B, 1) -> (B, 1, 3, P_S)."""
    # TODO(synk): torch retina selects in-box points with randperm /
    # np.random.choice; here selection is deterministic (first in-box points
    # in index order, cyclic repeat when fewer than P_S, zeros if box empty).
    half = d * 0.5
    lo = (l - half)[:, :, None]
    hi = (l + half)[:, :, None]
    mask = jnp.all((pts >= lo) & (pts <= hi), axis=1)              # (B, P)
    count = mask.sum(axis=1)                                       # (B,)
    key = jnp.where(mask, 0, P) + jnp.arange(P)[None, :]
    order = jnp.argsort(key, axis=1)                               # in-box first
    j = jnp.arange(P_S)[None, :]
    cnt = jnp.maximum(count, 1)[:, None]
    pos = jnp.where(j < count[:, None], j, j % cnt)
    gidx = jnp.take_along_axis(order, pos, axis=1)                 # (B, P_S)
    sampled = jnp.take_along_axis(pts, gidx[:, None, :], axis=2)   # (B, 3, P_S)
    sampled = jnp.where((count > 0)[:, None, None], sampled, 0.0)
    return sampled[:, None, :, :]


def foveate(x, l, d):
    """x: (B, C, D, P) with C*D == 3 -> phi: (B, NUM_SAMPLES, 3, P_S)."""
    pts = x.reshape(-1, 3, P).astype(jnp.float32)
    phis = []
    for _ in range(NUM_SAMPLES):
        phis.append(extract_box(pts, l, d))
        d = jnp.clip(2.0 * d, 0.0, 1.001)
    return jnp.concatenate(phis, axis=1)


# ---------------- Pallas kernel: the glimpse-network hot path ----------------
def glimpse_kernel(phi_ref, ld_ref,
                   wdt_ref, bdt_ref, w2_ref, b2_ref, w3_ref, b3_ref,
                   w4_ref, w5_ref, w6_ref, b456_ref, out_ref):
    # ---- "what" branch: DTanh surrogate, lane-dense, running max over P_S ----
    # TODO(synk): DTanh was not provided in the source file; a Deep-Sets style
    # surrogate is used: per-point tanh(Linear(3 -> H_G)) followed by a max
    # pool over the P_S points.
    wdt = wdt_ref[...]                         # (H_G, 3)
    bdt = bdt_ref[...]                         # (H_G, 1)
    wc0, wc1, wc2 = wdt[:, 0:1], wdt[:, 1:2], wdt[:, 2:3]
    acc = None
    for p in range(P_S):                       # static unroll (P_S == 8)
        pts = phi_ref[p]                       # (3, tile_n), lane-dense rows
        hp = jnp.tanh(wc0 * pts[0:1, :] + wc1 * pts[1:2, :]
                      + wc2 * pts[2:3, :] + bdt)       # (H_G, tile_n)
        acc = hp if acc is None else jnp.maximum(acc, hp)
    phi_out = jnp.maximum(acc, 0.0)            # relu(DTanh(phi)), (H_G, tile_n)

    # ---- "where" branch: relu(fc2(l)) as lane-dense broadcast FMAs ----
    ld = ld_ref[...]                           # (4, tile_n): rows 0..2 = l, row 3 = d
    w2 = w2_ref[...]                           # (H_L, 3)
    l_out = jnp.maximum(w2[:, 0:1] * ld[0:1, :] + w2[:, 1:2] * ld[1:2, :]
                        + w2[:, 2:3] * ld[2:3, :] + b2_ref[...], 0.0)  # (H_L, tile_n)

    # ---- "how" branch: relu(fc3(d)), K = 1 -> broadcast multiply ----
    d_out = jnp.maximum(w3_ref[...] * ld[3:4, :] + b3_ref[...], 0.0)   # (H_L, tile_n)

    # ---- fc4/fc5/fc6: three accumulated MXU dots, single pre-summed bias ----
    g = (jnp.dot(w4_ref[...], phi_out, preferred_element_type=jnp.float32)
         + jnp.dot(w5_ref[...], l_out, preferred_element_type=jnp.float32)
         + jnp.dot(w6_ref[...], d_out, preferred_element_type=jnp.float32)
         + b456_ref[...])                      # (H_OUT, tile_n), lane-dense
    out_ref[...] = jnp.maximum(g, 0.0)


def glimpse_network_forward(x, l_t_prev, d_t_prev, params, *, tile_n=2048):
    phi = foveate(x, l_t_prev, d_t_prev)            # (B, ns, 3, P_S)
    phi = phi.reshape(-1, P_S, 3)                   # raw reinterpret, matches torch .view
    n = phi.shape[0]
    assert n == l_t_prev.shape[0], "the sum in forward() requires num_samples == 1"

    # Feature-major slabs: batch rows go on the lane axis.
    phi_pm = jnp.transpose(phi, (1, 2, 0)).astype(jnp.float32)        # (P_S, 3, n)
    ld = jnp.concatenate(
        [l_t_prev.reshape(n, -1).astype(jnp.float32),
         d_t_prev.reshape(n, -1).astype(jnp.float32)], axis=1).T      # (4, n)

    # Lane-aligned tiling: tile_n a multiple of 128; keep >= 2 grid steps when
    # the batch allows it so both v7x TensorCores get work via "parallel".
    n128 = _round_up(n, 128)
    blocks = n128 // 128
    half_blocks = max(1, (blocks + 1) // 2)
    tile_n = 128 * max(1, min(max(tile_n, 128) // 128, half_blocks))
    n_pad = _round_up(n128, tile_n)
    if n_pad != n:
        phi_pm = jnp.pad(phi_pm, ((0, 0), (0, 0), (0, n_pad - n)))
        ld = jnp.pad(ld, ((0, 0), (0, n_pad - n)))

    # Transposed weights (out_features, in_features) and column biases.
    wdt_t = params["w_dt"].T                                 # (H_G, 3)
    bdt_c = params["b_dt"].T                                 # (H_G, 1)
    w2_t = params["w2"].T                                    # (H_L, 3)
    b2_c = params["b2"].T                                    # (H_L, 1)
    w3_c = params["w3"].T                                    # (H_L, 1)
    b3_c = params["b3"].T                                    # (H_L, 1)
    w4_t = params["w4"].T                                    # (H_OUT, H_G)
    w5_t = params["w5"].T                                    # (H_OUT, H_L)
    w6_t = params["w6"].T                                    # (H_OUT, H_L)
    b456_c = (params["b4"] + params["b5"] + params["b6"]).T  # (H_OUT, 1)

    grid = (n_pad // tile_n,)
    row3 = lambda i: (0, 0, i)   # activation tiles march down the lane axis
    row2 = lambda i: (0, i)
    rep = lambda i: (0, 0)       # weights / biases stay resident

    in_specs = [
        pl.BlockSpec((P_S, 3, tile_n), row3),    # phi, feature-major
        pl.BlockSpec((4, tile_n), row2),         # [l ; d] merged (one DMA)
        pl.BlockSpec((H_G, 3), rep),             # wdt^T
        pl.BlockSpec((H_G, 1), rep),             # b_dt
        pl.BlockSpec((H_L, 3), rep),             # w2^T
        pl.BlockSpec((H_L, 1), rep),             # b2
        pl.BlockSpec((H_L, 1), rep),             # w3^T
        pl.BlockSpec((H_L, 1), rep),             # b3
        pl.BlockSpec((H_OUT, H_G), rep),         # w4^T
        pl.BlockSpec((H_OUT, H_L), rep),         # w5^T
        pl.BlockSpec((H_OUT, H_L), rep),         # w6^T
        pl.BlockSpec((H_OUT, 1), rep),           # b4 + b5 + b6
    ]
    out_spec = pl.BlockSpec((H_OUT, tile_n), row2)   # lane-dense transposed output

    out_t = pl.pallas_call(
        glimpse_kernel,
        out_shape=jax.ShapeDtypeStruct((H_OUT, n_pad), jnp.float32),
        grid=grid,
        in_specs=in_specs,
        out_specs=out_spec,
        compiler_params=pltpu.CompilerParams(
            dimension_semantics=("parallel",)),
    )(phi_pm, ld,
      wdt_t, bdt_c, w2_t, b2_c, w3_c, b3_c, w4_t, w5_t, w6_t, b456_c)
    return out_t[:, :n].T                        # back to (n, H_OUT)


# ---------------- deterministic parameter init ----------------
def init_params(key):
    def linear(k, fan_in, fan_out):
        k1, k2 = jax.random.split(k)
        bound = 1.0 / (fan_in ** 0.5)
        w = jax.random.uniform(k1, (fan_in, fan_out), jnp.float32, -bound, bound)
        b = jax.random.uniform(k2, (1, fan_out), jnp.float32, -bound, bound)
        return w, b

    keys = jax.random.split(key, 6)
    p = {}
    p["w_dt"], p["b_dt"] = linear(keys[0], 3, H_G)      # DTanh surrogate (3 -> h_g)
    p["w2"], p["b2"] = linear(keys[1], 3, H_L)          # fc2
    p["w3"], p["b3"] = linear(keys[2], 1, H_L)          # fc3
    p["w4"], p["b4"] = linear(keys[3], H_G, H_OUT)      # fc4
    p["w5"], p["b5"] = linear(keys[4], H_L, H_OUT)      # fc5
    p["w6"], p["b6"] = linear(keys[5], H_L, H_OUT)      # fc6
    return p


if __name__ == "__main__":
    key = jax.random.PRNGKey(0)
    kx, kl = jax.random.split(key)
    x = jax.random.uniform(kx, (B, 1, 3, P), jnp.float32, -1.0, 1.0)   # point cloud
    l_t_prev = jax.random.uniform(kl, (B, 3), jnp.float32, -0.3, 0.3)  # glimpse center
    d_t_prev = jnp.full((B, 1), 0.8, jnp.float32)                      # box extent

    params = init_params(jax.random.PRNGKey(42))
    g_t = glimpse_network_forward(x, l_t_prev, d_t_prev, params)
    g_t = jax.block_until_ready(g_t)
    assert g_t.shape == (B, H_OUT) and g_t.dtype == jnp.float32
    print("KERNEL_OK")
</pallas_src>

<mosaic_0001>
module attributes {stable_mosaic.version = 11 : i64} {
  func.func @glimpse_kernel(%arg0: i32, %arg1: memref<8x3x128xf32, #tpu.memory_space<vmem>>, %arg2: memref<4x128xf32, #tpu.memory_space<vmem>>, %arg3: memref<32x3xf32, #tpu.memory_space<vmem>>, %arg4: memref<32x1xf32, #tpu.memory_space<vmem>>, %arg5: memref<16x3xf32, #tpu.memory_space<vmem>>, %arg6: memref<16x1xf32, #tpu.memory_space<vmem>>, %arg7: memref<16x1xf32, #tpu.memory_space<vmem>>, %arg8: memref<16x1xf32, #tpu.memory_space<vmem>>, %arg9: memref<48x32xf32, #tpu.memory_space<vmem>>, %arg10: memref<48x16xf32, #tpu.memory_space<vmem>>, %arg11: memref<48x16xf32, #tpu.memory_space<vmem>>, %arg12: memref<48x1xf32, #tpu.memory_space<vmem>>, %arg13: memref<48x128xf32, #tpu.memory_space<vmem>>) attributes {dimension_semantics = [#tpu.dimension_semantics<parallel>], iteration_bounds = array<i64: 1>, scalar_prefetch = 0 : i64, scratch_operands = 0 : i64, tpu.core_type = #tpu.core_type<tc>, window_params = [{transform_indices = @transform_0, window_bounds = array<i64: 8, 3, 128>}, {transform_indices = @transform_1, window_bounds = array<i64: 4, 128>}, {pipeline_mode = #tpu.pipeline_mode<synchronous>, transform_indices = @transform_2, window_bounds = array<i64: 32, 3>}, {pipeline_mode = #tpu.pipeline_mode<synchronous>, transform_indices = @transform_3, window_bounds = array<i64: 32, 1>}, {pipeline_mode = #tpu.pipeline_mode<synchronous>, transform_indices = @transform_4, window_bounds = array<i64: 16, 3>}, {pipeline_mode = #tpu.pipeline_mode<synchronous>, transform_indices = @transform_5, window_bounds = array<i64: 16, 1>}, {pipeline_mode = #tpu.pipeline_mode<synchronous>, transform_indices = @transform_6, window_bounds = array<i64: 16, 1>}, {pipeline_mode = #tpu.pipeline_mode<synchronous>, transform_indices = @transform_7, window_bounds = array<i64: 16, 1>}, {pipeline_mode = #tpu.pipeline_mode<synchronous>, transform_indices = @transform_8, window_bounds = array<i64: 48, 32>}, {pipeline_mode = #tpu.pipeline_mode<synchronous>, transform_indices = @transform_9, window_bounds = array<i64: 48, 16>}, {pipeline_mode = #tpu.pipeline_mode<synchronous>, transform_indices = @transform_10, window_bounds = array<i64: 48, 16>}, {pipeline_mode = #tpu.pipeline_mode<synchronous>, transform_indices = @transform_11, window_bounds = array<i64: 48, 1>}, {transform_indices = @transform_12, window_bounds = array<i64: 48, 128>}]} {
    %c0 = arith.constant 0 : index
    %c0_0 = arith.constant 0 : index
    %0 = vector.load %arg3[%c0, %c0_0] : memref<32x3xf32, #tpu.memory_space<vmem>>, vector<32x3xf32>
    %c0_1 = arith.constant 0 : index
    %c0_2 = arith.constant 0 : index
    %1 = vector.load %arg4[%c0_1, %c0_2] : memref<32x1xf32, #tpu.memory_space<vmem>>, vector<32x1xf32>
    %2 = vector.extract_strided_slice %0 {offsets = [0, 0], sizes = [32, 1], strides = [1, 1]} : vector<32x3xf32> to vector<32x1xf32>
    %3 = vector.extract_strided_slice %0 {offsets = [0, 1], sizes = [32, 1], strides = [1, 1]} : vector<32x3xf32> to vector<32x1xf32>
    %4 = vector.extract_strided_slice %0 {offsets = [0, 2], sizes = [32, 1], strides = [1, 1]} : vector<32x3xf32> to vector<32x1xf32>
    %c0_3 = arith.constant 0 : index
    %c0_4 = arith.constant 0 : index
    %c0_5 = arith.constant 0 : index
    %5 = vector.load %arg1[%c0_3, %c0_4, %c0_5] : memref<8x3x128xf32, #tpu.memory_space<vmem>>, vector<1x3x128xf32>
    %6 = vector.shape_cast %5 : vector<1x3x128xf32> to vector<3x128xf32>
    %7 = vector.extract_strided_slice %6 {offsets = [0, 0], sizes = [1, 128], strides = [1, 1]} : vector<3x128xf32> to vector<1x128xf32>
    %8 = vector.broadcast %2 : vector<32x1xf32> to vector<32x128xf32>
    %9 = vector.broadcast %7 : vector<1x128xf32> to vector<32x128xf32>
    %10 = arith.mulf %8, %9 : vector<32x128xf32>
    %11 = vector.extract_strided_slice %6 {offsets = [1, 0], sizes = [1, 128], strides = [1, 1]} : vector<3x128xf32> to vector<1x128xf32>
    %12 = vector.broadcast %3 : vector<32x1xf32> to vector<32x128xf32>
    %13 = vector.broadcast %11 : vector<1x128xf32> to vector<32x128xf32>
    %14 = arith.mulf %12, %13 : vector<32x128xf32>
    %15 = arith.addf %10, %14 : vector<32x128xf32>
    %16 = vector.extract_strided_slice %6 {offsets = [2, 0], sizes = [1, 128], strides = [1, 1]} : vector<3x128xf32> to vector<1x128xf32>
    %17 = vector.broadcast %4 : vector<32x1xf32> to vector<32x128xf32>
    %18 = vector.broadcast %16 : vector<1x128xf32> to vector<32x128xf32>
    %19 = arith.mulf %17, %18 : vector<32x128xf32>
    %20 = arith.addf %15, %19 : vector<32x128xf32>
    %21 = vector.broadcast %1 : vector<32x1xf32> to vector<32x128xf32>
    %22 = arith.addf %20, %21 : vector<32x128xf32>
    %23 = math.tanh %22 : vector<32x128xf32>
    %c1 = arith.constant 1 : index
    %c0_6 = arith.constant 0 : index
    %c0_7 = arith.constant 0 : index
    %24 = vector.load %arg1[%c1, %c0_6, %c0_7] : memref<8x3x128xf32, #tpu.memory_space<vmem>>, vector<1x3x128xf32>
    %25 = vector.shape_cast %24 : vector<1x3x128xf32> to vector<3x128xf32>
    %26 = vector.extract_strided_slice %25 {offsets = [0, 0], sizes = [1, 128], strides = [1, 1]} : vector<3x128xf32> to vector<1x128xf32>
    %27 = vector.broadcast %2 : vector<32x1xf32> to vector<32x128xf32>
    %28 = vector.broadcast %26 : vector<1x128xf32> to vector<32x128xf32>
    %29 = arith.mulf %27, %28 : vector<32x128xf32>
    %30 = vector.extract_strided_slice %25 {offsets = [1, 0], sizes = [1, 128], strides = [1, 1]} : vector<3x128xf32> to vector<1x128xf32>
    %31 = vector.broadcast %3 : vector<32x1xf32> to vector<32x128xf32>
    %32 = vector.broadcast %30 : vector<1x128xf32> to vector<32x128xf32>
    %33 = arith.mulf %31, %32 : vector<32x128xf32>
    %34 = arith.addf %29, %33 : vector<32x128xf32>
    %35 = vector.extract_strided_slice %25 {offsets = [2, 0], sizes = [1, 128], strides = [1, 1]} : vector<3x128xf32> to vector<1x128xf32>
    %36 = vector.broadcast %4 : vector<32x1xf32> to vector<32x128xf32>
    %37 = vector.broadcast %35 : vector<1x128xf32> to vector<32x128xf32>
    %38 = arith.mulf %36, %37 : vector<32x128xf32>
    %39 = arith.addf %34, %38 : vector<32x128xf32>
    %40 = vector.broadcast %1 : vector<32x1xf32> to vector<32x128xf32>
    %41 = arith.addf %39, %40 : vector<32x128xf32>
    %42 = math.tanh %41 : vector<32x128xf32>
    %43 = arith.maximumf %23, %42 : vector<32x128xf32>
    %c2 = arith.constant 2 : index
    %c0_8 = arith.constant 0 : index
    %c0_9 = arith.constant 0 : index
    %44 = vector.load %arg1[%c2, %c0_8, %c0_9] : memref<8x3x128xf32, #tpu.memory_space<vmem>>, vector<1x3x128xf32>
    %45 = vector.shape_cast %44 : vector<1x3x128xf32> to vector<3x128xf32>
    %46 = vector.extract_strided_slice %45 {offsets = [0, 0], sizes = [1, 128], strides = [1, 1]} : vector<3x128xf32> to vector<1x128xf32>
    %47 = vector.broadcast %2 : vector<32x1xf32> to vector<32x128xf32>
    %48 = vector.broadcast %46 : vector<1x128xf32> to vector<32x128xf32>
    %49 = arith.mulf %47, %48 : vector<32x128xf32>
    %50 = vector.extract_strided_slice %45 {offsets = [1, 0], sizes = [1, 128], strides = [1, 1]} : vector<3x128xf32> to vector<1x128xf32>
    %51 = vector.broadcast %3 : vector<32x1xf32> to vector<32x128xf32>
    %52 = vector.broadcast %50 : vector<1x128xf32> to vector<32x128xf32>
    %53 = arith.mulf %51, %52 : vector<32x128xf32>
    %54 = arith.addf %49, %53 : vector<32x128xf32>
    %55 = vector.extract_strided_slice %45 {offsets = [2, 0], sizes = [1, 128], strides = [1, 1]} : vector<3x128xf32> to vector<1x128xf32>
    %56 = vector.broadcast %4 : vector<32x1xf32> to vector<32x128xf32>
    %57 = vector.broadcast %55 : vector<1x128xf32> to vector<32x128xf32>
    %58 = arith.mulf %56, %57 : vector<32x128xf32>
    %59 = arith.addf %54, %58 : vector<32x128xf32>
    %60 = vector.broadcast %1 : vector<32x1xf32> to vector<32x128xf32>
    %61 = arith.addf %59, %60 : vector<32x128xf32>
    %62 = math.tanh %61 : vector<32x128xf32>
    %63 = arith.maximumf %43, %62 : vector<32x128xf32>
    %c3 = arith.constant 3 : index
    %c0_10 = arith.constant 0 : index
    %c0_11 = arith.constant 0 : index
    %64 = vector.load %arg1[%c3, %c0_10, %c0_11] : memref<8x3x128xf32, #tpu.memory_space<vmem>>, vector<1x3x128xf32>
    %65 = vector.shape_cast %64 : vector<1x3x128xf32> to vector<3x128xf32>
    %66 = vector.extract_strided_slice %65 {offsets = [0, 0], sizes = [1, 128], strides = [1, 1]} : vector<3x128xf32> to vector<1x128xf32>
    %67 = vector.broadcast %2 : vector<32x1xf32> to vector<32x128xf32>
    %68 = vector.broadcast %66 : vector<1x128xf32> to vector<32x128xf32>
    %69 = arith.mulf %67, %68 : vector<32x128xf32>
    %70 = vector.extract_strided_slice %65 {offsets = [1, 0], sizes = [1, 128], strides = [1, 1]} : vector<3x128xf32> to vector<1x128xf32>
    %71 = vector.broadcast %3 : vector<32x1xf32> to vector<32x128xf32>
    %72 = vector.broadcast %70 : vector<1x128xf32> to vector<32x128xf32>
    %73 = arith.mulf %71, %72 : vector<32x128xf32>
    %74 = arith.addf %69, %73 : vector<32x128xf32>
    %75 = vector.extract_strided_slice %65 {offsets = [2, 0], sizes = [1, 128], strides = [1, 1]} : vector<3x128xf32> to vector<1x128xf32>
    %76 = vector.broadcast %4 : vector<32x1xf32> to vector<32x128xf32>
    %77 = vector.broadcast %75 : vector<1x128xf32> to vector<32x128xf32>
    %78 = arith.mulf %76, %77 : vector<32x128xf32>
    %79 = arith.addf %74, %78 : vector<32x128xf32>
    %80 = vector.broadcast %1 : vector<32x1xf32> to vector<32x128xf32>
    %81 = arith.addf %79, %80 : vector<32x128xf32>
    %82 = math.tanh %81 : vector<32x128xf32>
    %83 = arith.maximumf %63, %82 : vector<32x128xf32>
    %c4 = arith.constant 4 : index
    %c0_12 = arith.constant 0 : index
    %c0_13 = arith.constant 0 : index
    %84 = vector.load %arg1[%c4, %c0_12, %c0_13] : memref<8x3x128xf32, #tpu.memory_space<vmem>>, vector<1x3x128xf32>
    %85 = vector.shape_cast %84 : vector<1x3x128xf32> to vector<3x128xf32>
    %86 = vector.extract_strided_slice %85 {offsets = [0, 0], sizes = [1, 128], strides = [1, 1]} : vector<3x128xf32> to vector<1x128xf32>
    %87 = vector.broadcast %2 : vector<32x1xf32> to vector<32x128xf32>
    %88 = vector.broadcast %86 : vector<1x128xf32> to vector<32x128xf32>
    %89 = arith.mulf %87, %88 : vector<32x128xf32>
    %90 = vector.extract_strided_slice %85 {offsets = [1, 0], sizes = [1, 128], strides = [1, 1]} : vector<3x128xf32> to vector<1x128xf32>
    %91 = vector.broadcast %3 : vector<32x1xf32> to vector<32x128xf32>
    %92 = vector.broadcast %90 : vector<1x128xf32> to vector<32x128xf32>
    %93 = arith.mulf %91, %92 : vector<32x128xf32>
    %94 = arith.addf %89, %93 : vector<32x128xf32>
    %95 = vector.extract_strided_slice %85 {offsets = [2, 0], sizes = [1, 128], strides = [1, 1]} : vector<3x128xf32> to vector<1x128xf32>
    %96 = vector.broadcast %4 : vector<32x1xf32> to vector<32x128xf32>
    %97 = vector.broadcast %95 : vector<1x128xf32> to vector<32x128xf32>
    %98 = arith.mulf %96, %97 : vector<32x128xf32>
    %99 = arith.addf %94, %98 : vector<32x128xf32>
    %100 = vector.broadcast %1 : vector<32x1xf32> to vector<32x128xf32>
    %101 = arith.addf %99, %100 : vector<32x128xf32>
    %102 = math.tanh %101 : vector<32x128xf32>
    %103 = arith.maximumf %83, %102 : vector<32x128xf32>
    %c5 = arith.constant 5 : index
    %c0_14 = arith.constant 0 : index
    %c0_15 = arith.constant 0 : index
    %104 = vector.load %arg1[%c5, %c0_14, %c0_15] : memref<8x3x128xf32, #tpu.memory_space<vmem>>, vector<1x3x128xf32>
    %105 = vector.shape_cast %104 : vector<1x3x128xf32> to vector<3x128xf32>
    %106 = vector.extract_strided_slice %105 {offsets = [0, 0], sizes = [1, 128], strides = [1, 1]} : vector<3x128xf32> to vector<1x128xf32>
    %107 = vector.broadcast %2 : vector<32x1xf32> to vector<32x128xf32>
    %108 = vector.broadcast %106 : vector<1x128xf32> to vector<32x128xf32>
    %109 = arith.mulf %107, %108 : vector<32x128xf32>
    %110 = vector.extract_strided_slice %105 {offsets = [1, 0], sizes = [1, 128], strides = [1, 1]} : vector<3x128xf32> to vector<1x128xf32>
    %111 = vector.broadcast %3 : vector<32x1xf32> to vector<32x128xf32>
    %112 = vector.broadcast %110 : vector<1x128xf32> to vector<32x128xf32>
    %113 = arith.mulf %111, %112 : vector<32x128xf32>
    %114 = arith.addf %109, %113 : vector<32x128xf32>
    %115 = vector.extract_strided_slice %105 {offsets = [2, 0], sizes = [1, 128], strides = [1, 1]} : vector<3x128xf32> to vector<1x128xf32>
    %116 = vector.broadcast %4 : vector<32x1xf32> to vector<32x128xf32>
    %117 = vector.broadcast %115 : vector<1x128xf32> to vector<32x128xf32>
    %118 = arith.mulf %116, %117 : vector<32x128xf32>
    %119 = arith.addf %114, %118 : vector<32x128xf32>
    %120 = vector.broadcast %1 : vector<32x1xf32> to vector<32x128xf32>
    %121 = arith.addf %119, %120 : vector<32x128xf32>
    %122 = math.tanh %121 : vector<32x128xf32>
    %123 = arith.maximumf %103, %122 : vector<32x128xf32>
    %c6 = arith.constant 6 : index
    %c0_16 = arith.constant 0 : index
    %c0_17 = arith.constant 0 : index
    %124 = vector.load %arg1[%c6, %c0_16, %c0_17] : memref<8x3x128xf32, #tpu.memory_space<vmem>>, vector<1x3x128xf32>
    %125 = vector.shape_cast %124 : vector<1x3x128xf32> to vector<3x128xf32>
    %126 = vector.extract_strided_slice %125 {offsets = [0, 0], sizes = [1, 128], strides = [1, 1]} : vector<3x128xf32> to vector<1x128xf32>
    %127 = vector.broadcast %2 : vector<32x1xf32> to vector<32x128xf32>
    %128 = vector.broadcast %126 : vector<1x128xf32> to vector<32x128xf32>
    %129 = arith.mulf %127, %128 : vector<32x128xf32>
    %130 = vector.extract_strided_slice %125 {offsets = [1, 0], sizes = [1, 128], strides = [1, 1]} : vector<3x128xf32> to vector<1x128xf32>
    %131 = vector.broadcast %3 : vector<32x1xf32> to vector<32x128xf32>
    %132 = vector.broadcast %130 : vector<1x128xf32> to vector<32x128xf32>
    %133 = arith.mulf %131, %132 : vector<32x128xf32>
    %134 = arith.addf %129, %133 : vector<32x128xf32>
    %135 = vector.extract_strided_slice %125 {offsets = [2, 0], sizes = [1, 128], strides = [1, 1]} : vector<3x128xf32> to vector<1x128xf32>
    %136 = vector.broadcast %4 : vector<32x1xf32> to vector<32x128xf32>
    %137 = vector.broadcast %135 : vector<1x128xf32> to vector<32x128xf32>
    %138 = arith.mulf %136, %137 : vector<32x128xf32>
    %139 = arith.addf %134, %138 : vector<32x128xf32>
    %140 = vector.broadcast %1 : vector<32x1xf32> to vector<32x128xf32>
    %141 = arith.addf %139, %140 : vector<32x128xf32>
    %142 = math.tanh %141 : vector<32x128xf32>
    %143 = arith.maximumf %123, %142 : vector<32x128xf32>
    %c7 = arith.constant 7 : index
    %c0_18 = arith.constant 0 : index
    %c0_19 = arith.constant 0 : index
    %144 = vector.load %arg1[%c7, %c0_18, %c0_19] : memref<8x3x128xf32, #tpu.memory_space<vmem>>, vector<1x3x128xf32>
    %145 = vector.shape_cast %144 : vector<1x3x128xf32> to vector<3x128xf32>
    %146 = vector.extract_strided_slice %145 {offsets = [0, 0], sizes = [1, 128], strides = [1, 1]} : vector<3x128xf32> to vector<1x128xf32>
    %147 = vector.broadcast %2 : vector<32x1xf32> to vector<32x128xf32>
    %148 = vector.broadcast %146 : vector<1x128xf32> to vector<32x128xf32>
    %149 = arith.mulf %147, %148 : vector<32x128xf32>
    %150 = vector.extract_strided_slice %145 {offsets = [1, 0], sizes = [1, 128], strides = [1, 1]} : vector<3x128xf32> to vector<1x128xf32>
    %151 = vector.broadcast %3 : vector<32x1xf32> to vector<32x128xf32>
    %152 = vector.broadcast %150 : vector<1x128xf32> to vector<32x128xf32>
    %153 = arith.mulf %151, %152 : vector<32x128xf32>
    %154 = arith.addf %149, %153 : vector<32x128xf32>
    %155 = vector.extract_strided_slice %145 {offsets = [2, 0], sizes = [1, 128], strides = [1, 1]} : vector<3x128xf32> to vector<1x128xf32>
    %156 = vector.broadcast %4 : vector<32x1xf32> to vector<32x128xf32>
    %157 = vector.broadcast %155 : vector<1x128xf32> to vector<32x128xf32>
    %158 = arith.mulf %156, %157 : vector<32x128xf32>
    %159 = arith.addf %154, %158 : vector<32x128xf32>
    %160 = vector.broadcast %1 : vector<32x1xf32> to vector<32x128xf32>
    %161 = arith.addf %159, %160 : vector<32x128xf32>
    %162 = math.tanh %161 : vector<32x128xf32>
    %163 = arith.maximumf %143, %162 : vector<32x128xf32>
    %cst = arith.constant 0.000000e+00 : f32
    %164 = vector.broadcast %cst : f32 to vector<32x128xf32>
    %165 = arith.maximumf %163, %164 : vector<32x128xf32>
    %c0_20 = arith.constant 0 : index
    %c0_21 = arith.constant 0 : index
    %166 = vector.load %arg2[%c0_20, %c0_21] : memref<4x128xf32, #tpu.memory_space<vmem>>, vector<4x128xf32>
    %c0_22 = arith.constant 0 : index
    %c0_23 = arith.constant 0 : index
    %167 = vector.load %arg5[%c0_22, %c0_23] : memref<16x3xf32, #tpu.memory_space<vmem>>, vector<16x3xf32>
    %168 = vector.extract_strided_slice %167 {offsets = [0, 0], sizes = [16, 1], strides = [1, 1]} : vector<16x3xf32> to vector<16x1xf32>
    %169 = vector.extract_strided_slice %166 {offsets = [0, 0], sizes = [1, 128], strides = [1, 1]} : vector<4x128xf32> to vector<1x128xf32>
    %170 = vector.broadcast %168 : vector<16x1xf32> to vector<16x128xf32>
    %171 = vector.broadcast %169 : vector<1x128xf32> to vector<16x128xf32>
    %172 = arith.mulf %170, %171 : vector<16x128xf32>
    %173 = vector.extract_strided_slice %167 {offsets = [0, 1], sizes = [16, 1], strides = [1, 1]} : vector<16x3xf32> to vector<16x1xf32>
    %174 = vector.extract_strided_slice %166 {offsets = [1, 0], sizes = [1, 128], strides = [1, 1]} : vector<4x128xf32> to vector<1x128xf32>
    %175 = vector.broadcast %173 : vector<16x1xf32> to vector<16x128xf32>
    %176 = vector.broadcast %174 : vector<1x128xf32> to vector<16x128xf32>
    %177 = arith.mulf %175, %176 : vector<16x128xf32>
    %178 = arith.addf %172, %177 : vector<16x128xf32>
    %179 = vector.extract_strided_slice %167 {offsets = [0, 2], sizes = [16, 1], strides = [1, 1]} : vector<16x3xf32> to vector<16x1xf32>
    %180 = vector.extract_strided_slice %166 {offsets = [2, 0], sizes = [1, 128], strides = [1, 1]} : vector<4x128xf32> to vector<1x128xf32>
    %181 = vector.broadcast %179 : vector<16x1xf32> to vector<16x128xf32>
    %182 = vector.broadcast %180 : vector<1x128xf32> to vector<16x128xf32>
    %183 = arith.mulf %181, %182 : vector<16x128xf32>
    %184 = arith.addf %178, %183 : vector<16x128xf32>
    %c0_24 = arith.constant 0 : index
    %c0_25 = arith.constant 0 : index
    %185 = vector.load %arg6[%c0_24, %c0_25] : memref<16x1xf32, #tpu.memory_space<vmem>>, vector<16x1xf32>
    %186 = vector.broadcast %185 : vector<16x1xf32> to vector<16x128xf32>
    %187 = arith.addf %184, %186 : vector<16x128xf32>
    %cst_26 = arith.constant 0.000000e+00 : f32
    %188 = vector.broadcast %cst_26 : f32 to vector<16x128xf32>
    %189 = arith.maximumf %187, %188 : vector<16x128xf32>
    %c0_27 = arith.constant 0 : index
    %c0_28 = arith.constant 0 : index
    %190 = vector.load %arg7[%c0_27, %c0_28] : memref<16x1xf32, #tpu.memory_space<vmem>>, vector<16x1xf32>
    %191 = vector.extract_strided_slice %166 {offsets = [3, 0], sizes = [1, 128], strides = [1, 1]} : vector<4x128xf32> to vector<1x128xf32>
    %192 = vector.broadcast %190 : vector<16x1xf32> to vector<16x128xf32>
    %193 = vector.broadcast %191 : vector<1x128xf32> to vector<16x128xf32>
    %194 = arith.mulf %192, %193 : vector<16x128xf32>
    %c0_29 = arith.constant 0 : index
    %c0_30 = arith.constant 0 : index
    %195 = vector.load %arg8[%c0_29, %c0_30] : memref<16x1xf32, #tpu.memory_space<vmem>>, vector<16x1xf32>
    %196 = vector.broadcast %195 : vector<16x1xf32> to vector<16x128xf32>
    %197 = arith.addf %194, %196 : vector<16x128xf32>
    %cst_31 = arith.constant 0.000000e+00 : f32
    %198 = vector.broadcast %cst_31 : f32 to vector<16x128xf32>
    %199 = arith.maximumf %197, %198 : vector<16x128xf32>
    %c0_32 = arith.constant 0 : index
    %c0_33 = arith.constant 0 : index
    %200 = vector.load %arg9[%c0_32, %c0_33] : memref<48x32xf32, #tpu.memory_space<vmem>>, vector<48x32xf32>
    %cst_34 = arith.constant dense<0.000000e+00> : vector<48x128xf32>
    %201 = tpu.matmul %200, %165, %cst_34 {dimension_numbers = #tpu.dot_dimension_numbers<[1], [0], [0], [1], [0, 0, 1, 1], [], []>} : vector<48x32xf32>, vector<32x128xf32>, vector<48x128xf32> -> vector<48x128xf32>
    %c0_35 = arith.constant 0 : index
    %c0_36 = arith.constant 0 : index
    %202 = vector.load %arg10[%c0_35, %c0_36] : memref<48x16xf32, #tpu.memory_space<vmem>>, vector<48x16xf32>
    %cst_37 = arith.constant dense<0.000000e+00> : vector<48x128xf32>
    %203 = tpu.matmul %202, %189, %cst_37 {dimension_numbers = #tpu.dot_dimension_numbers<[1], [0], [0], [1], [0, 0, 1, 1], [], []>} : vector<48x16xf32>, vector<16x128xf32>, vector<48x128xf32> -> vector<48x128xf32>
    %204 = arith.addf %201, %203 : vector<48x128xf32>
    %c0_38 = arith.constant 0 : index
    %c0_39 = arith.constant 0 : index
    %205 = vector.load %arg11[%c0_38, %c0_39] : memref<48x16xf32, #tpu.memory_space<vmem>>, vector<48x16xf32>
    %cst_40 = arith.constant dense<0.000000e+00> : vector<48x128xf32>
    %206 = tpu.matmul %205, %199, %cst_40 {dimension_numbers = #tpu.dot_dimension_numbers<[1], [0], [0], [1], [0, 0, 1, 1], [], []>} : vector<48x16xf32>, vector<16x128xf32>, vector<48x128xf32> -> vector<48x128xf32>
    %207 = arith.addf %204, %206 : vector<48x128xf32>
    %c0_41 = arith.constant 0 : index
    %c0_42 = arith.constant 0 : index
    %208 = vector.load %arg12[%c0_41, %c0_42] : memref<48x1xf32, #tpu.memory_space<vmem>>, vector<48x1xf32>
    %209 = vector.broadcast %208 : vector<48x1xf32> to vector<48x128xf32>
    %210 = arith.addf %207, %209 : vector<48x128xf32>
    %cst_43 = arith.constant 0.000000e+00 : f32
    %211 = vector.broadcast %cst_43 : f32 to vector<48x128xf32>
    %212 = arith.maximumf %210, %211 : vector<48x128xf32>
    %c0_44 = arith.constant 0 : index
    %c0_45 = arith.constant 0 : index
    %213 = vector.load %arg13[%c0_44, %c0_45] : memref<48x128xf32, #tpu.memory_space<vmem>>, vector<48x128xf32>
    tpu.vector_store %arg13[%c0_44, %c0_45], %212 {strides = array<i32>} : memref<48x128xf32, #tpu.memory_space<vmem>>, vector<48x128xf32>,
    return
  }
  func.func @transform_0(%arg0: i32) -> (i32, i32, i32) {
    %c0_i32 = arith.constant 0 : i32
    %c0_i32_0 = arith.constant 0 : i32
    %c0_i32_1 = arith.constant 0 : i32
    return %c0_i32, %c0_i32_0, %arg0 : i32, i32, i32
  }
  func.func @transform_1(%arg0: i32) -> (i32, i32) {
    %c0_i32 = arith.constant 0 : i32
    %c0_i32_0 = arith.constant 0 : i32
    return %c0_i32, %arg0 : i32, i32
  }
  func.func @transform_2(%arg0: i32) -> (i32, i32) {
    %c0_i32 = arith.constant 0 : i32
    %c0_i32_0 = arith.constant 0 : i32
    %c0_i32_1 = arith.constant 0 : i32
    return %c0_i32, %c0_i32_0 : i32, i32
  }
  func.func @transform_3(%arg0: i32) -> (i32, i32) {
    %c0_i32 = arith.constant 0 : i32
    %c0_i32_0 = arith.constant 0 : i32
    %c0_i32_1 = arith.constant 0 : i32
    return %c0_i32, %c0_i32_0 : i32, i32
  }
  func.func @transform_4(%arg0: i32) -> (i32, i32) {
    %c0_i32 = arith.constant 0 : i32
    %c0_i32_0 = arith.constant 0 : i32
    %c0_i32_1 = arith.constant 0 : i32
    return %c0_i32, %c0_i32_0 : i32, i32
  }
  func.func @transform_5(%arg0: i32) -> (i32, i32) {
    %c0_i32 = arith.constant 0 : i32
    %c0_i32_0 = arith.constant 0 : i32
    %c0_i32_1 = arith.constant 0 : i32
    return %c0_i32, %c0_i32_0 : i32, i32
  }
  func.func @transform_6(%arg0: i32) -> (i32, i32) {
    %c0_i32 = arith.constant 0 : i32
    %c0_i32_0 = arith.constant 0 : i32
    %c0_i32_1 = arith.constant 0 : i32
    return %c0_i32, %c0_i32_0 : i32, i32
  }
  func.func @transform_7(%arg0: i32) -> (i32, i32) {
    %c0_i32 = arith.constant 0 : i32
    %c0_i32_0 = arith.constant 0 : i32
    %c0_i32_1 = arith.constant 0 : i32
    return %c0_i32, %c0_i32_0 : i32, i32
  }
  func.func @transform_8(%arg0: i32) -> (i32, i32) {
    %c0_i32 = arith.constant 0 : i32
    %c0_i32_0 = arith.constant 0 : i32
    %c0_i32_1 = arith.constant 0 : i32
    return %c0_i32, %c0_i32_0 : i32, i32
  }
  func.func @transform_9(%arg0: i32) -> (i32, i32) {
    %c0_i32 = arith.constant 0 : i32
    %c0_i32_0 = arith.constant 0 : i32
    %c0_i32_1 = arith.constant 0 : i32
    return %c0_i32, %c0_i32_0 : i32, i32
  }
  func.func @transform_10(%arg0: i32) -> (i32, i32) {
    %c0_i32 = arith.constant 0 : i32
    %c0_i32_0 = arith.constant 0 : i32
    %c0_i32_1 = arith.constant 0 : i32
    return %c0_i32, %c0_i32_0 : i32, i32
  }
  func.func @transform_11(%arg0: i32) -> (i32, i32) {
    %c0_i32 = arith.constant 0 : i32
    %c0_i32_0 = arith.constant 0 : i32
    %c0_i32_1 = arith.constant 0 : i32
    return %c0_i32, %c0_i32_0 : i32, i32
  }
  func.func @transform_12(%arg0: i32) -> (i32, i32) {
    %c0_i32 = arith.constant 0 : i32
    %c0_i32_0 = arith.constant 0 : i32
    return %c0_i32, %arg0 : i32, i32
  }
}

</mosaic_0001>

<llo_original>
// kernel: tpu_custom_call.1
$region0: #{tpu_custom_call.1}
  #allocation0 [shape = 'u32[]', space=smem, size = 0x4, offset = 0x4, fixed_abs, tag = 'smem constant byte address 0x4 - core index']
  #allocation1 [shape = 'u32[72,128]{1,0:T(1,128)}', space=vmem, size = 0x9000, scoped, tag = 'internal scratch']
  %s0 = inlined_call_operand.vmem [shape: f32[8,3,128], index: 0, kind: input, shape index: {}]
  %s1 = inlined_call_operand.vmem [shape: f32[4,128], index: 1, kind: input, shape index: {}]
  %s2 = inlined_call_operand.vmem [shape: f32[32,3], index: 2, kind: input, shape index: {}]
  %s3 = inlined_call_operand.vmem [shape: f32[32,1], index: 3, kind: input, shape index: {}]
  %s4 = inlined_call_operand.vmem [shape: f32[16,3], index: 4, kind: input, shape index: {}]
  %s5 = inlined_call_operand.vmem [shape: f32[16,1], index: 5, kind: input, shape index: {}]
  %s6 = inlined_call_operand.vmem [shape: f32[16,1], index: 6, kind: input, shape index: {}]
  %s7 = inlined_call_operand.vmem [shape: f32[16,1], index: 7, kind: input, shape index: {}]
  %s8 = inlined_call_operand.vmem [shape: f32[48,32], index: 8, kind: input, shape index: {}]
  %s9 = inlined_call_operand.vmem [shape: f32[48,16], index: 9, kind: input, shape index: {}]
  %s10 = inlined_call_operand.vmem [shape: f32[48,16], index: 10, kind: input, shape index: {}]
  %s11 = inlined_call_operand.vmem [shape: f32[48,1], index: 11, kind: input, shape index: {}]
  %s12 = inlined_call_operand.hbm [shape: f32[48,128], index: 12, kind: output, shape index: {}]
  %s13 = sld [smem:[#allocation0]]
  $region58: #{tpu_custom_call.1} parent=0
    _
  %s15 = ssub.s32 1, %s13
  %s16 = scalar_select 0, %s15, %s13
  $region1: #{tpu_custom_call.1} parent=0
    #allocation2 [shape = 'u8[24576]{0}', space=vmem, size = 0x6000, scoped, tag = 'output window, operand 0, single buffered']
    #allocation3 [shape = 's32[1]{0}', space=sflag, size = 0x4, scoped, tag = 'scoped memory for tpu_custom_call.1']
    %17 = vsyncpa [#allocation3], 0
    // Predicated region
    $region2: #{tpu_custom_call.1} parent=1 // pred_check
      _
    $region3: #{tpu_custom_call.1} parent=1 // pred_check_branch
      %19 = sbr.rel (0) target = $region5
    $region4: #{tpu_custom_call.1} parent=1 // pred_region
      _
    $region5: #{tpu_custom_call.1} parent=1 // pred_fallthru
      _
    // Predicated region
    $region6: #{tpu_custom_call.1} parent=1 // pred_check
      _
    $region7: #{tpu_custom_call.1} parent=1 // pred_check_branch
      %21 = sbr.rel (0) target = $region9
    $region8: #{tpu_custom_call.1} parent=1 // pred_region
      _
    $region9: #{tpu_custom_call.1} parent=1 // pred_fallthru
      _
    // Predicated region
    $region10: #{tpu_custom_call.1} parent=1 // pred_check
      _
    $region11: #{tpu_custom_call.1} parent=1 // pred_check_branch
      %23 = sbr.rel (0) target = $region13
    $region12: #{tpu_custom_call.1} parent=1 // pred_region
      _
    $region13: #{tpu_custom_call.1} parent=1 // pred_fallthru
      _
    // Predicated region
    $region14: #{tpu_custom_call.1} parent=1 // pred_check
      _
    $region15: #{tpu_custom_call.1} parent=1 // pred_check_branch
      %25 = sbr.rel (0) target = $region17
    $region16: #{tpu_custom_call.1} parent=1 // pred_region
      _
    $region17: #{tpu_custom_call.1} parent=1 // pred_fallthru
      _
    // Predicated region
    $region18: #{tpu_custom_call.1} parent=1 // pred_check
      _
    $region19: #{tpu_custom_call.1} parent=1 // pred_check_branch
      %27 = sbr.rel (0) target = $region21
    $region20: #{tpu_custom_call.1} parent=1 // pred_region
      _
    $region21: #{tpu_custom_call.1} parent=1 // pred_fallthru
      _
    // Predicated region
    $region22: #{tpu_custom_call.1} parent=1 // pred_check
      _
    $region23: #{tpu_custom_call.1} parent=1 // pred_check_branch
      %29 = sbr.rel (0) target = $region25
    $region24: #{tpu_custom_call.1} parent=1 // pred_region
      _
    $region25: #{tpu_custom_call.1} parent=1 // pred_fallthru
      _
    // Predicated region
    $region26: #{tpu_custom_call.1} parent=1 // pred_check
      _
    $region27: #{tpu_custom_call.1} parent=1 // pred_check_branch
      %31 = sbr.rel (0) target = $region29
    $region28: #{tpu_custom_call.1} parent=1 // pred_region
      _
    $region29: #{tpu_custom_call.1} parent=1 // pred_fallthru
      _
    // Predicated region
    $region30: #{tpu_custom_call.1} parent=1 // pred_check
      _
    $region31: #{tpu_custom_call.1} parent=1 // pred_check_branch
      %33 = sbr.rel (0) target = $region33
    $region32: #{tpu_custom_call.1} parent=1 // pred_region
      _
    $region33: #{tpu_custom_call.1} parent=1 // pred_fallthru
      _
    // Predicated region
    $region34: #{tpu_custom_call.1} parent=1 // pred_check
      _
    $region35: #{tpu_custom_call.1} parent=1 // pred_check_branch
      %35 = sbr.rel (0) target = $region37
    $region36: #{tpu_custom_call.1} parent=1 // pred_region
      _
    $region37: #{tpu_custom_call.1} parent=1 // pred_fallthru
      _
    // Predicated region
    $region38: #{tpu_custom_call.1} parent=1 // pred_check
      _
    $region39: #{tpu_custom_call.1} parent=1 // pred_check_branch
      %37 = sbr.rel (0) target = $region41
    $region40: #{tpu_custom_call.1} parent=1 // pred_region
      _
    $region41: #{tpu_custom_call.1} parent=1 // pred_fallthru
      _
    // Predicated region
    $region42: #{tpu_custom_call.1} parent=1 // pred_check
      _
    $region43: #{tpu_custom_call.1} parent=1 // pred_check_branch
      %39 = sbr.rel (0) target = $region45
    $region44: #{tpu_custom_call.1} parent=1 // pred_region
      _
    $region45: #{tpu_custom_call.1} parent=1 // pred_fallthru
      _
    // Predicated region
    $region46: #{tpu_custom_call.1} parent=1 // pred_check
      _
    $region47: #{tpu_custom_call.1} parent=1 // pred_check_branch
      %41 = sbr.rel (0) target = $region49
    $region48: #{tpu_custom_call.1} parent=1 // pred_region
      _
    $region49: #{tpu_custom_call.1} parent=1 // pred_fallthru
      _
    %v42 = vld [vmem:[%s2] sm:$0xff]
    %v43 = vld [vmem:[%s2 + $0x8] sm:$0xff]
    %v44 = vld [vmem:[%s2 + $0x10] sm:$0xff]
    %v45 = vld [vmem:[%s2 + $0x18] sm:$0xff]
    %v46 = vld [vmem:[%s3] sm:$0xff]
    %v47 = vld [vmem:[%s3 + $0x8] sm:$0xff]
    %v48 = vld [vmem:[%s3 + $0x10] sm:$0xff]
    %v49 = vld [vmem:[%s3 + $0x18] sm:$0xff]
    %v50 = vld [vmem:[%s0] sm:$0x7]
    %52 = vset.pattern.permute.xlu0 0
    %53 = vperm.xlu0 %52, %v42
    %v54 = vpop.permute.xlu0 %53
    %57 = vset.pattern.permute.xlu0 0
    %58 = vperm.xlu0 %57, %v43
    %v59 = vpop.permute.xlu0 %58
    %62 = vset.pattern.permute.xlu0 0
    %63 = vperm.xlu0 %62, %v44
    %v64 = vpop.permute.xlu0 %63
    %67 = vset.pattern.permute.xlu0 0
    %68 = vperm.xlu0 %67, %v45
    %v69 = vpop.permute.xlu0 %68
    %v71 = vperm.slane %v50, 0
    %v72 = vmul.f32 %v54, %v71
    %v73 = vmul.f32 %v59, %v71
    %v74 = vmul.f32 %v64, %v71
    %v75 = vmul.f32 %v69, %v71
    %76 = vset.pattern.permute.xlu0 1
    %77 = vperm.xlu0 %76, %v42
    %v78 = vpop.permute.xlu0 %77
    %80 = vset.pattern.permute.xlu0 1
    %81 = vperm.xlu0 %80, %v43
    %v82 = vpop.permute.xlu0 %81
    %84 = vset.pattern.permute.xlu0 1
    %85 = vperm.xlu0 %84, %v44
    %v86 = vpop.permute.xlu0 %85
    %88 = vset.pattern.permute.xlu0 1
    %89 = vperm.xlu0 %88, %v45
    %v90 = vpop.permute.xlu0 %89
    %v92 = vperm.slane %v50, 1
    %v93 = vmul.f32 %v78, %v92
    %v94 = vmul.f32 %v82, %v92
    %v95 = vmul.f32 %v86, %v92
    %v96 = vmul.f32 %v90, %v92
    %v97 = vadd.f32 %v72, %v93
    %v98 = vadd.f32 %v73, %v94
    %v99 = vadd.f32 %v74, %v95
    %v100 = vadd.f32 %v75, %v96
    %101 = vset.pattern.permute.xlu0 2
    %102 = vperm.xlu0 %101, %v42
    %v103 = vpop.permute.xlu0 %102
    %105 = vset.pattern.permute.xlu0 2
    %106 = vperm.xlu0 %105, %v43
    %v107 = vpop.permute.xlu0 %106
    %109 = vset.pattern.permute.xlu0 2
    %110 = vperm.xlu0 %109, %v44
    %v111 = vpop.permute.xlu0 %110
    %113 = vset.pattern.permute.xlu0 2
    %114 = vperm.xlu0 %113, %v45
    %v115 = vpop.permute.xlu0 %114
    %v117 = vperm.slane %v50, 2
    %v118 = vmul.f32 %v103, %v117
    %v119 = vmul.f32 %v107, %v117
    %v120 = vmul.f32 %v111, %v117
    %v121 = vmul.f32 %v115, %v117
    %v122 = vadd.f32 %v97, %v118
    %v123 = vadd.f32 %v98, %v119
    %v124 = vadd.f32 %v99, %v120
    %v125 = vadd.f32 %v100, %v121
    %127 = vset.pattern.permute.xlu0 0
    %128 = vperm.xlu0 %127, %v46
    %v129 = vpop.permute.xlu0 %128
    %132 = vset.pattern.permute.xlu0 0
    %133 = vperm.xlu0 %132, %v47
    %v134 = vpop.permute.xlu0 %133
    %137 = vset.pattern.permute.xlu0 0
    %138 = vperm.xlu0 %137, %v48
    %v139 = vpop.permute.xlu0 %138
    %142 = vset.pattern.permute.xlu0 0
    %143 = vperm.xlu0 %142, %v49
    %v144 = vpop.permute.xlu0 %143
    %v146 = vadd.f32 %v122, %v129
    %v147 = vadd.f32 %v123, %v134
    %v148 = vadd.f32 %v124, %v139
    %v149 = vadd.f32 %v125, %v144
    %v150 = vtanh.pop %v146
    %v151 = vtanh.pop %v147
    %v152 = vtanh.pop %v148
    %v153 = vtanh.pop %v149
    %s154 = scalar_lea.vmem %s0, 4
    %v155 = vld [vmem:[%s154] sm:$0x7]
    %v156 = vperm.slane %v155, 0
    %v157 = vmul.f32 %v54, %v156
    %v158 = vmul.f32 %v59, %v156
    %v159 = vmul.f32 %v64, %v156
    %v160 = vmul.f32 %v69, %v156
    %v161 = vperm.slane %v155, 1
    %v162 = vmul.f32 %v78, %v161
    %v163 = vmul.f32 %v82, %v161
    %v164 = vmul.f32 %v86, %v161
    %v165 = vmul.f32 %v90, %v161
    %v166 = vadd.f32 %v157, %v162
    %v167 = vadd.f32 %v158, %v163
    %v168 = vadd.f32 %v159, %v164
    %v169 = vadd.f32 %v160, %v165
    %v170 = vperm.slane %v155, 2
    %v171 = vmul.f32 %v103, %v170
    %v172 = vmul.f32 %v107, %v170
    %v173 = vmul.f32 %v111, %v170
    %v174 = vmul.f32 %v115, %v170
    %v175 = vadd.f32 %v166, %v171
    %v176 = vadd.f32 %v167, %v172
    %v177 = vadd.f32 %v168, %v173
    %v178 = vadd.f32 %v169, %v174
    %v179 = vadd.f32 %v175, %v129
    %v180 = vadd.f32 %v176, %v134
    %v181 = vadd.f32 %v177, %v139
    %v182 = vadd.f32 %v178, %v144
    %v183 = vtanh.pop %v179
    %v184 = vtanh.pop %v180
    %v185 = vtanh.pop %v181
    %v186 = vtanh.pop %v182
    %v187 = vmax.f32 %v150, %v183
    %v188 = vmax.f32 %v151, %v184
    %v189 = vmax.f32 %v152, %v185
    %v190 = vmax.f32 %v153, %v186
    %s191 = scalar_lea.vmem %s0, 8
    %v192 = vld [vmem:[%s191] sm:$0x7]
    %v193 = vperm.slane %v192, 0
    %v194 = vmul.f32 %v54, %v193
    %v195 = vmul.f32 %v59, %v193
    %v196 = vmul.f32 %v64, %v193
    %v197 = vmul.f32 %v69, %v193
    %v198 = vperm.slane %v192, 1
    %v199 = vmul.f32 %v78, %v198
    %v200 = vmul.f32 %v82, %v198
    %v201 = vmul.f32 %v86, %v198
    %v202 = vmul.f32 %v90, %v198
    %v203 = vadd.f32 %v194, %v199
    %v204 = vadd.f32 %v195, %v200
    %v205 = vadd.f32 %v196, %v201
    %v206 = vadd.f32 %v197, %v202
    %v207 = vperm.slane %v192, 2
    %v208 = vmul.f32 %v103, %v207
    %v209 = vmul.f32 %v107, %v207
    %v210 = vmul.f32 %v111, %v207
    %v211 = vmul.f32 %v115, %v207
    %v212 = vadd.f32 %v203, %v208
    %v213 = vadd.f32 %v204, %v209
    %v214 = vadd.f32 %v205, %v210
    %v215 = vadd.f32 %v206, %v211
    %v216 = vadd.f32 %v212, %v129
    %v217 = vadd.f32 %v213, %v134
    %v218 = vadd.f32 %v214, %v139
    %v219 = vadd.f32 %v215, %v144
    %v220 = vtanh.pop %v216
    %v221 = vtanh.pop %v217
    %v222 = vtanh.pop %v218
    %v223 = vtanh.pop %v219
    %v224 = vmax.f32 %v187, %v220
    %v225 = vmax.f32 %v188, %v221
    %v226 = vmax.f32 %v189, %v222
    %v227 = vmax.f32 %v190, %v223
    %s228 = scalar_lea.vmem %s0, 12
    %v229 = vld [vmem:[%s228] sm:$0x7]
    %v230 = vperm.slane %v229, 0
    %v231 = vmul.f32 %v54, %v230
    %v232 = vmul.f32 %v59, %v230
    %v233 = vmul.f32 %v64, %v230
    %v234 = vmul.f32 %v69, %v230
    %v235 = vperm.slane %v229, 1
    %v236 = vmul.f32 %v78, %v235
    %v237 = vmul.f32 %v82, %v235
    %v238 = vmul.f32 %v86, %v235
    %v239 = vmul.f32 %v90, %v235
    %v240 = vadd.f32 %v231, %v236
    %v241 = vadd.f32 %v232, %v237
    %v242 = vadd.f32 %v233, %v238
    %v243 = vadd.f32 %v234, %v239
    %v244 = vperm.slane %v229, 2
    %v245 = vmul.f32 %v103, %v244
    %v246 = vmul.f32 %v107, %v244
    %v247 = vmul.f32 %v111, %v244
    %v248 = vmul.f32 %v115, %v244
    %v249 = vadd.f32 %v240, %v245
    %v250 = vadd.f32 %v241, %v246
    %v251 = vadd.f32 %v242, %v247
    %v252 = vadd.f32 %v243, %v248
    %v253 = vadd.f32 %v249, %v129
    %v254 = vadd.f32 %v250, %v134
    %v255 = vadd.f32 %v251, %v139
    %v256 = vadd.f32 %v252, %v144
    %v257 = vtanh.pop %v253
    %v258 = vtanh.pop %v254
    %v259 = vtanh.pop %v255
    %v260 = vtanh.pop %v256
    %v261 = vmax.f32 %v224, %v257
    %v262 = vmax.f32 %v225, %v258
    %v263 = vmax.f32 %v226, %v259
    %v264 = vmax.f32 %v227, %v260
    %s265 = scalar_lea.vmem %s0, 16
    %v266 = vld [vmem:[%s265] sm:$0x7]
    %v267 = vperm.slane %v266, 0
    %v268 = vmul.f32 %v54, %v267
    %v269 = vmul.f32 %v59, %v267
    %v270 = vmul.f32 %v64, %v267
    %v271 = vmul.f32 %v69, %v267
    %v272 = vperm.slane %v266, 1
    %v273 = vmul.f32 %v78, %v272
    %v274 = vmul.f32 %v82, %v272
    %v275 = vmul.f32 %v86, %v272
    %v276 = vmul.f32 %v90, %v272
    %v277 = vadd.f32 %v268, %v273
    %v278 = vadd.f32 %v269, %v274
    %v279 = vadd.f32 %v270, %v275
    %v280 = vadd.f32 %v271, %v276
    %v281 = vperm.slane %v266, 2
    %v282 = vmul.f32 %v103, %v281
    %v283 = vmul.f32 %v107, %v281
    %v284 = vmul.f32 %v111, %v281
    %v285 = vmul.f32 %v115, %v281
    %v286 = vadd.f32 %v277, %v282
    %v287 = vadd.f32 %v278, %v283
    %v288 = vadd.f32 %v279, %v284
    %v289 = vadd.f32 %v280, %v285
    %v290 = vadd.f32 %v286, %v129
    %v291 = vadd.f32 %v287, %v134
    %v292 = vadd.f32 %v288, %v139
    %v293 = vadd.f32 %v289, %v144
    %v294 = vtanh.pop %v290
    %v295 = vtanh.pop %v291
    %v296 = vtanh.pop %v292
    %v297 = vtanh.pop %v293
    %v298 = vmax.f32 %v261, %v294
    %v299 = vmax.f32 %v262, %v295
    %v300 = vmax.f32 %v263, %v296
    %v301 = vmax.f32 %v264, %v297
    %s302 = scalar_lea.vmem %s0, 20
    %v303 = vld [vmem:[%s302] sm:$0x7]
    %v304 = vperm.slane %v303, 0
    %v305 = vmul.f32 %v54, %v304
    %v306 = vmul.f32 %v59, %v304
    %v307 = vmul.f32 %v64, %v304
    %v308 = vmul.f32 %v69, %v304
    %v309 = vperm.slane %v303, 1
    %v310 = vmul.f32 %v78, %v309
    %v311 = vmul.f32 %v82, %v309
    %v312 = vmul.f32 %v86, %v309
    %v313 = vmul.f32 %v90, %v309
    %v314 = vadd.f32 %v305, %v310
    %v315 = vadd.f32 %v306, %v311
    %v316 = vadd.f32 %v307, %v312
    %v317 = vadd.f32 %v308, %v313
    %v318 = vperm.slane %v303, 2
    %v319 = vmul.f32 %v103, %v318
    %v320 = vmul.f32 %v107, %v318
    %v321 = vmul.f32 %v111, %v318
    %v322 = vmul.f32 %v115, %v318
    %v323 = vadd.f32 %v314, %v319
    %v324 = vadd.f32 %v315, %v320
    %v325 = vadd.f32 %v316, %v321
    %v326 = vadd.f32 %v317, %v322
    %v327 = vadd.f32 %v323, %v129
    %v328 = vadd.f32 %v324, %v134
    %v329 = vadd.f32 %v325, %v139
    %v330 = vadd.f32 %v326, %v144
    %v331 = vtanh.pop %v327
    %v332 = vtanh.pop %v328
    %v333 = vtanh.pop %v329
    %v334 = vtanh.pop %v330
    %v335 = vmax.f32 %v298, %v331
    %v336 = vmax.f32 %v299, %v332
    %v337 = vmax.f32 %v300, %v333
    %v338 = vmax.f32 %v301, %v334
    %s339 = scalar_lea.vmem %s0, 24
    %v340 = vld [vmem:[%s339] sm:$0x7]
    %v341 = vperm.slane %v340, 0
    %v342 = vmul.f32 %v54, %v341
    %v343 = vmul.f32 %v59, %v341
    %v344 = vmul.f32 %v64, %v341
    %v345 = vmul.f32 %v69, %v341
    %v346 = vperm.slane %v340, 1
    %v347 = vmul.f32 %v78, %v346
    %v348 = vmul.f32 %v82, %v346
    %v349 = vmul.f32 %v86, %v346
    %v350 = vmul.f32 %v90, %v346
    %v351 = vadd.f32 %v342, %v347
    %v352 = vadd.f32 %v343, %v348
    %v353 = vadd.f32 %v344, %v349
    %v354 = vadd.f32 %v345, %v350
    %v355 = vperm.slane %v340, 2
    %v356 = vmul.f32 %v103, %v355
    %v357 = vmul.f32 %v107, %v355
    %v358 = vmul.f32 %v111, %v355
    %v359 = vmul.f32 %v115, %v355
    %v360 = vadd.f32 %v351, %v356
    %v361 = vadd.f32 %v352, %v357
    %v362 = vadd.f32 %v353, %v358
    %v363 = vadd.f32 %v354, %v359
    %v364 = vadd.f32 %v360, %v129
    %v365 = vadd.f32 %v361, %v134
    %v366 = vadd.f32 %v362, %v139
    %v367 = vadd.f32 %v363, %v144
    %v368 = vtanh.pop %v364
    %v369 = vtanh.pop %v365
    %v370 = vtanh.pop %v366
    %v371 = vtanh.pop %v367
    %v372 = vmax.f32 %v335, %v368
    %v373 = vmax.f32 %v336, %v369
    %v374 = vmax.f32 %v337, %v370
    %v375 = vmax.f32 %v338, %v371
    %s376 = scalar_lea.vmem %s0, 28
    %v377 = vld [vmem:[%s376] sm:$0x7]
    %v378 = vperm.slane %v377, 0
    %v379 = vmul.f32 %v54, %v378
    %v380 = vmul.f32 %v59, %v378
    %v381 = vmul.f32 %v64, %v378
    %v382 = vmul.f32 %v69, %v378
    %v383 = vperm.slane %v377, 1
    %v384 = vmul.f32 %v78, %v383
    %v385 = vmul.f32 %v82, %v383
    %v386 = vmul.f32 %v86, %v383
    %v387 = vmul.f32 %v90, %v383
    %v388 = vadd.f32 %v379, %v384
    %v389 = vadd.f32 %v380, %v385
    %v390 = vadd.f32 %v381, %v386
    %v391 = vadd.f32 %v382, %v387
    %v392 = vperm.slane %v377, 2
    %v393 = vmul.f32 %v103, %v392
    %v394 = vmul.f32 %v107, %v392
    %v395 = vmul.f32 %v111, %v392
    %v396 = vmul.f32 %v115, %v392
    %v397 = vadd.f32 %v388, %v393
    %v398 = vadd.f32 %v389, %v394
    %v399 = vadd.f32 %v390, %v395
    %v400 = vadd.f32 %v391, %v396
    %v401 = vadd.f32 %v397, %v129
    %v402 = vadd.f32 %v398, %v134
    %v403 = vadd.f32 %v399, %v139
    %v404 = vadd.f32 %v400, %v144
    %v405 = vtanh.pop %v401
    %v406 = vtanh.pop %v402
    %v407 = vtanh.pop %v403
    %v408 = vtanh.pop %v404
    %v409 = vmax.f32 %v372, %v405
    %v410 = vmax.f32 %v373, %v406
    %v411 = vmax.f32 %v374, %v407
    %v412 = vmax.f32 %v375, %v408
    %v413 = vmax.f32 %v409, 0.0
    %v414 = vmax.f32 %v410, 0.0
    %v415 = vmax.f32 %v411, 0.0
    %v416 = vmax.f32 %v412, 0.0
    %v417 = vld [vmem:[%s1] sm:$0xf]
    %v418 = vld [vmem:[%s4] sm:$0xff]
    %v419 = vld [vmem:[%s4 + $0x8] sm:$0xff]
    %421 = vset.pattern.permute.xlu0 0
    %422 = vperm.xlu0 %421, %v418
    %v423 = vpop.permute.xlu0 %422
    %426 = vset.pattern.permute.xlu0 0
    %427 = vperm.xlu0 %426, %v419
    %v428 = vpop.permute.xlu0 %427
    %v430 = vperm.slane %v417, 0
    %v431 = vmul.f32 %v423, %v430
    %v432 = vmul.f32 %v428, %v430
    %433 = vset.pattern.permute.xlu0 1
    %434 = vperm.xlu0 %433, %v418
    %v435 = vpop.permute.xlu0 %434
    %437 = vset.pattern.permute.xlu0 1
    %438 = vperm.xlu0 %437, %v419
    %v439 = vpop.permute.xlu0 %438
    %v441 = vperm.slane %v417, 1
    %v442 = vmul.f32 %v435, %v441
    %v443 = vmul.f32 %v439, %v441
    %v444 = vadd.f32 %v431, %v442
    %v445 = vadd.f32 %v432, %v443
    %446 = vset.pattern.permute.xlu0 2
    %447 = vperm.xlu0 %446, %v418
    %v448 = vpop.permute.xlu0 %447
    %450 = vset.pattern.permute.xlu0 2
    %451 = vperm.xlu0 %450, %v419
    %v452 = vpop.permute.xlu0 %451
    %v454 = vperm.slane %v417, 2
    %v455 = vmul.f32 %v448, %v454
    %v456 = vmul.f32 %v452, %v454
    %v457 = vadd.f32 %v444, %v455
    %v458 = vadd.f32 %v445, %v456
    %v459 = vld [vmem:[%s5] sm:$0xff]
    %v460 = vld [vmem:[%s5 + $0x8] sm:$0xff]
    %462 = vset.pattern.permute.xlu0 0
    %463 = vperm.xlu0 %462, %v459
    %v464 = vpop.permute.xlu0 %463
    %467 = vset.pattern.permute.xlu0 0
    %468 = vperm.xlu0 %467, %v460
    %v469 = vpop.permute.xlu0 %468
    %v471 = vadd.f32 %v457, %v464
    %v472 = vadd.f32 %v458, %v469
    %v473 = vmax.f32 %v471, 0.0
    %v474 = vmax.f32 %v472, 0.0
    %v475 = vld [vmem:[%s6] sm:$0xff]
    %v476 = vld [vmem:[%s6 + $0x8] sm:$0xff]
    %478 = vset.pattern.permute.xlu0 0
    %479 = vperm.xlu0 %478, %v475
    %v480 = vpop.permute.xlu0 %479
    %483 = vset.pattern.permute.xlu0 0
    %484 = vperm.xlu0 %483, %v476
    %v485 = vpop.permute.xlu0 %484
    %v487 = vperm.slane %v417, 3
    %v488 = vmul.f32 %v480, %v487
    %v489 = vmul.f32 %v485, %v487
    %v490 = vld [vmem:[%s7] sm:$0xff]
    %v491 = vld [vmem:[%s7 + $0x8] sm:$0xff]
    %493 = vset.pattern.permute.xlu0 0
    %494 = vperm.xlu0 %493, %v490
    %v495 = vpop.permute.xlu0 %494
    %498 = vset.pattern.permute.xlu0 0
    %499 = vperm.xlu0 %498, %v491
    %v500 = vpop.permute.xlu0 %499
    %v502 = vadd.f32 %v488, %v495
    %v503 = vadd.f32 %v489, %v500
    %v504 = vmax.f32 %v502, 0.0
    %v505 = vmax.f32 %v503, 0.0
    %v506 = vld [vmem:[%s8] sm:$0xff]
    %v507 = vld [vmem:[%s8 + $0x8] sm:$0xff]
    %v508 = vld [vmem:[%s8 + $0x10] sm:$0xff]
    %v509 = vld [vmem:[%s8 + $0x18] sm:$0xff]
    %v510 = vld [vmem:[%s8 + $0x20] sm:$0xff]
    %v511 = vld [vmem:[%s8 + $0x28] sm:$0xff]
    %v512 = vld [vmem:[%s9] sm:$0xff]
    %v513 = vld [vmem:[%s9 + $0x8] sm:$0xff]
    %v514 = vld [vmem:[%s9 + $0x10] sm:$0xff]
    %v515 = vld [vmem:[%s9 + $0x18] sm:$0xff]
    %v516 = vld [vmem:[%s9 + $0x20] sm:$0xff]
    %v517 = vld [vmem:[%s9 + $0x28] sm:$0xff]
    %vm518 = vcmask 130048
    %v520 = vsel %vm518, %v512, 0
    %v523 = vsel %vm518, %v513, 0
    %v526 = vsel %vm518, %v514, 0
    %v529 = vsel %vm518, %v515, 0
    %v532 = vsel %vm518, %v516, 0
    %v535 = vsel %vm518, %v517, 0
    %537 = vmatpush.msra.mxu0 0.0
    %538 = vmatpush.msra.mxu0 0.0
    %539 = vmatpush.msra.mxu0 0.0
    %540 = vmatpush.msra.mxu0 0.0
    %541 = vmatpush.msra.mxu0 0.0
    %542 = vmatpush.msra.mxu0 0.0
    %543 = vmatpush.msra.mxu0 0.0
    %544 = vmatpush.msra.mxu0 0.0
    %545 = vmatpush.msra.mxu0 0.0
    %546 = vmatpush.msra.mxu0 0.0
    %547 = vmatpush.msra.mxu0 0.0
    %548 = vmatpush.msra.mxu0 0.0
    %549 = vmatpush.msra.mxu0 0.0
    %550 = vmatpush.msra.mxu0 0.0
    %551 = vmatpush.msra.mxu0 %v474
    %552 = vmatpush.msra.mxu0 %v473
    %553 = vmatmul.f32.gmra.mxu0 %v520
    %v554 = vpop.f32.mrf.mxu0
    %v555 = vadd.f32 0.0, %v554
    %556 = vmatmul.f32.gmra.mxu0 %v523
    %v557 = vpop.f32.mrf.mxu0
    %v558 = vadd.f32 0.0, %v557
    %559 = vmatmul.f32.gmra.mxu0 %v526
    %v560 = vpop.f32.mrf.mxu0
    %v561 = vadd.f32 0.0, %v560
    %562 = vmatmul.f32.gmra.mxu0 %v529
    %v563 = vpop.f32.mrf.mxu0
    %v564 = vadd.f32 0.0, %v563
    %565 = vmatmul.f32.gmra.mxu0 %v532
    %v566 = vpop.f32.mrf.mxu0
    %v567 = vadd.f32 0.0, %v566
    %568 = vmatmul.f32.gmra.mxu0 %v535
    %v569 = vpop.f32.mrf.mxu0
    %v570 = vadd.f32 0.0, %v569
    %571 = vdwg.mxu0
    %vm572 = vcmask 261120
    %v574 = vsel %vm572, %v506, 0
    %v577 = vsel %vm572, %v507, 0
    %v580 = vsel %vm572, %v508, 0
    %v583 = vsel %vm572, %v509, 0
    %v586 = vsel %vm572, %v510, 0
    %v589 = vsel %vm572, %v511, 0
    %591 = vmatpush.msra.mxu0 0.0
    %592 = vmatpush.msra.mxu0 0.0
    %593 = vmatpush.msra.mxu0 0.0
    %594 = vmatpush.msra.mxu0 0.0
    %595 = vmatpush.msra.mxu0 0.0
    %596 = vmatpush.msra.mxu0 0.0
    %597 = vmatpush.msra.mxu0 0.0
    %598 = vmatpush.msra.mxu0 0.0
    %599 = vmatpush.msra.mxu0 0.0
    %600 = vmatpush.msra.mxu0 0.0
    %601 = vmatpush.msra.mxu0 0.0
    %602 = vmatpush.msra.mxu0 0.0
    %603 = vmatpush.msra.mxu0 %v416
    %604 = vmatpush.msra.mxu0 %v415
    %605 = vmatpush.msra.mxu0 %v414
    %606 = vmatpush.msra.mxu0 %v413
    %607 = vmatmul.f32.gmra.mxu0 %v574
    %v608 = vpop.f32.mrf.mxu0
    %v609 = vadd.f32 %v555, %v608
    %610 = vmatmul.f32.gmra.mxu0 %v577
    %v611 = vpop.f32.mrf.mxu0
    %v612 = vadd.f32 %v558, %v611
    %613 = vmatmul.f32.gmra.mxu0 %v580
    %v614 = vpop.f32.mrf.mxu0
    %v615 = vadd.f32 %v561, %v614
    %616 = vmatmul.f32.gmra.mxu0 %v583
    %v617 = vpop.f32.mrf.mxu0
    %v618 = vadd.f32 %v564, %v617
    %619 = vmatmul.f32.gmra.mxu0 %v586
    %v620 = vpop.f32.mrf.mxu0
    %v621 = vadd.f32 %v567, %v620
    %622 = vmatmul.f32.gmra.mxu0 %v589
    %v623 = vpop.f32.mrf.mxu0
    %v624 = vadd.f32 %v570, %v623
    %625 = vdwg.mxu0
    %v626 = vld [vmem:[%s10] sm:$0xff]
    %v627 = vld [vmem:[%s10 + $0x8] sm:$0xff]
    %v628 = vld [vmem:[%s10 + $0x10] sm:$0xff]
    %v629 = vld [vmem:[%s10 + $0x18] sm:$0xff]
    %v630 = vld [vmem:[%s10 + $0x20] sm:$0xff]
    %v631 = vld [vmem:[%s10 + $0x28] sm:$0xff]
    %v633 = vsel %vm518, %v626, 0
    %v636 = vsel %vm518, %v627, 0
    %v639 = vsel %vm518, %v628, 0
    %v642 = vsel %vm518, %v629, 0
    %v645 = vsel %vm518, %v630, 0
    %v648 = vsel %vm518, %v631, 0
    %650 = vmatpush.msra.mxu0 0.0
    %651 = vmatpush.msra.mxu0 0.0
    %652 = vmatpush.msra.mxu0 0.0
    %653 = vmatpush.msra.mxu0 0.0
    %654 = vmatpush.msra.mxu0 0.0
    %655 = vmatpush.msra.mxu0 0.0
    %656 = vmatpush.msra.mxu0 0.0
    %657 = vmatpush.msra.mxu0 0.0
    %658 = vmatpush.msra.mxu0 0.0
    %659 = vmatpush.msra.mxu0 0.0
    %660 = vmatpush.msra.mxu0 0.0
    %661 = vmatpush.msra.mxu0 0.0
    %662 = vmatpush.msra.mxu0 0.0
    %663 = vmatpush.msra.mxu0 0.0
    %664 = vmatpush.msra.mxu0 %v505
    %665 = vmatpush.msra.mxu0 %v504
    %666 = vmatmul.f32.gmra.mxu0 %v633
    %v667 = vpop.f32.mrf.mxu0
    %v668 = vadd.f32 0.0, %v667
    %669 = vmatmul.f32.gmra.mxu0 %v636
    %v670 = vpop.f32.mrf.mxu0
    %v671 = vadd.f32 0.0, %v670
    %672 = vmatmul.f32.gmra.mxu0 %v639
    %v673 = vpop.f32.mrf.mxu0
    %v674 = vadd.f32 0.0, %v673
    %675 = vmatmul.f32.gmra.mxu0 %v642
    %v676 = vpop.f32.mrf.mxu0
    %v677 = vadd.f32 0.0, %v676
    %678 = vmatmul.f32.gmra.mxu0 %v645
    %v679 = vpop.f32.mrf.mxu0
    %v680 = vadd.f32 0.0, %v679
    %681 = vmatmul.f32.gmra.mxu0 %v648
    %v682 = vpop.f32.mrf.mxu0
    %v683 = vadd.f32 0.0, %v682
    %684 = vdwg.mxu0
    %v685 = vadd.f32 %v609, %v668
    %v686 = vadd.f32 %v612, %v671
    %v687 = vadd.f32 %v615, %v674
    %v688 = vadd.f32 %v618, %v677
    %v689 = vadd.f32 %v621, %v680
    %v690 = vadd.f32 %v624, %v683
    %v691 = vld [vmem:[%s11] sm:$0xff]
    %v692 = vld [vmem:[%s11 + $0x8] sm:$0xff]
    %v693 = vld [vmem:[%s11 + $0x10] sm:$0xff]
    %v694 = vld [vmem:[%s11 + $0x18] sm:$0xff]
    %v695 = vld [vmem:[%s11 + $0x20] sm:$0xff]
    %v696 = vld [vmem:[%s11 + $0x28] sm:$0xff]
    %698 = vset.pattern.permute.xlu0 0
    %699 = vperm.xlu0 %698, %v691
    %v700 = vpop.permute.xlu0 %699
    %703 = vset.pattern.permute.xlu0 0
    %704 = vperm.xlu0 %703, %v692
    %v705 = vpop.permute.xlu0 %704
    %708 = vset.pattern.permute.xlu0 0
    %709 = vperm.xlu0 %708, %v693
    %v710 = vpop.permute.xlu0 %709
    %713 = vset.pattern.permute.xlu0 0
    %714 = vperm.xlu0 %713, %v694
    %v715 = vpop.permute.xlu0 %714
    %718 = vset.pattern.permute.xlu0 0
    %719 = vperm.xlu0 %718, %v695
    %v720 = vpop.permute.xlu0 %719
    %723 = vset.pattern.permute.xlu0 0
    %724 = vperm.xlu0 %723, %v696
    %v725 = vpop.permute.xlu0 %724
    %v727 = vadd.f32 %v685, %v700
    %v728 = vadd.f32 %v686, %v705
    %v729 = vadd.f32 %v687, %v710
    %v730 = vadd.f32 %v688, %v715
    %v731 = vadd.f32 %v689, %v720
    %v732 = vadd.f32 %v690, %v725
    %v733 = vmax.f32 %v727, 0.0
    %v734 = vmax.f32 %v728, 0.0
    %v735 = vmax.f32 %v729, 0.0
    %v736 = vmax.f32 %v730, 0.0
    %v737 = vmax.f32 %v731, 0.0
    %v738 = vmax.f32 %v732, 0.0
    %739 = vst [vmem:[#allocation2] sm:$0xff] %v733
    %740 = vst [vmem:[#allocation2 + $0x8] sm:$0xff] %v734
    %741 = vst [vmem:[#allocation2 + $0x10] sm:$0xff] %v735
    %742 = vst [vmem:[#allocation2 + $0x18] sm:$0xff] %v736
    %743 = vst [vmem:[#allocation2 + $0x20] sm:$0xff] %v737
    %744 = vst [vmem:[#allocation2 + $0x28] sm:$0xff] %v738
    // Predicated region
    $region50: #{tpu_custom_call.1} parent=1 // pred_check
      _
    $region51: #{tpu_custom_call.1} parent=1 // pred_check_branch
      %746 = sbr.rel (0) target = $region53
    $region52: #{tpu_custom_call.1} parent=1 // pred_region
      %748 = vsyncadd [#allocation3], 0
      %s749 = sshll.u32 [#allocation2], 4
      %s750 = int_to_ptr.vmem [resolvable:$true] %s749
      %s751 = sshll.u32 %s12, 4
      %s752 = int_to_ptr.hbm [resolvable:$true] %s751
      %757 = dma.vmem_to_hbm [thread:$0]  %s750, 768, %s752, [#allocation3], 128, 128, 8
    $region53: #{tpu_custom_call.1} parent=1 // pred_fallthru
      _
    // Predicated region
    $region54: #{tpu_custom_call.1} parent=1 // pred_check
      _
    $region55: #{tpu_custom_call.1} parent=1 // pred_check_branch
      %759 = sbr.rel (0) target = $region57
    $region56: #{tpu_custom_call.1} parent=1 // pred_region
      %761 = dma.done [#allocation3], 768
    $region57: #{tpu_custom_call.1} parent=1 // pred_fallthru
      _
    %762 = vsyncpa [#allocation3], 1

</llo_original>
